<compile_context>
chip_gen: v7x
topology: tpu7x:2x2x1
jax: 0.10.0
libtpu: 0.0.40
codegen_flags: <defaults>
</compile_context>

<pallas_src>
import functools

import numpy as np
import jax
import jax.numpy as jnp
from jax import lax
from jax.experimental import pallas as pl
from jax.experimental.pallas import tpu as pltpu


def _layer_norm_2d_kernel(x_ref, wb_ref, o_ref, *, eps):
    """One block = Bt batch rows x all C channels x a lane-dense spatial tile."""
    x = x_ref[...].astype(jnp.float32)                 # (Bt, C, T)
    u = jnp.mean(x, axis=1, keepdims=True)             # (Bt, 1, T)  E[x]
    m2 = jnp.mean(x * x, axis=1, keepdims=True)        # (Bt, 1, T)  E[x^2]
    var = jnp.maximum(m2 - u * u, 0.0)                 # clamp FP cancellation
    inv = lax.rsqrt(var + eps)                         # EUP rsqrt, no divide

    wb = wb_ref[...]                                   # (2, C, 1) f32
    w = wb[0]                                          # (C, 1)
    b = wb[1]                                          # (C, 1)

    scale = w * inv                                    # (Bt, C, T)
    shift = b - u * scale                              # (Bt, C, T)
    o_ref[...] = (x * scale + shift).astype(o_ref.dtype)


def _round_up(v: int, m: int) -> int:
    return -(-v // m) * m


def _block_budget_bytes() -> int:
    """Per-block f32 budget for the promoted (Bt, C, T) tile, per generation."""
    try:
        kind = jax.devices()[0].device_kind.lower()
    except Exception:
        return 2 << 20
    if "v7" in kind:
        return 2 << 20      # v7x: 64 MiB VMEM/TC, HBM-bound -> small safe tiles
    if "v5" in kind:
        return 2 << 20      # v5e: 16 MiB scoped default (explicitly raised below)
    return 4 << 20          # v6e & friends: 128 MiB VMEM -> larger tiles are free


def _choose_batch_tile(b: int, c: int, hw: int, budget_bytes: int) -> int:
    """Group several batch rows per block when a full (C, hw) map is tiny."""
    full_block_f32 = 4 * c * hw
    if b <= 1 or full_block_f32 >= (256 << 10):
        return 1
    max_bt = max(1, budget_bytes // full_block_f32)
    # Keep >= 2 batch grid steps so both v7x TensorCores get work.
    max_bt = min(max_bt, max(1, b // 2))
    bt = 1
    for cand in range(1, max_bt + 1):
        if b % cand == 0:
            bt = cand
    return bt


def _choose_spatial_tile(hw: int, c: int, bt: int, budget_bytes: int) -> int:
    """Lane-dense spatial tile sized so the promoted f32 block fits the budget."""
    max_t = max(128, (budget_bytes // (4 * c * bt)) // 128 * 128)
    if hw <= max_t:
        return hw                                   # full extent fits in one block
    if hw % 128 == 0:
        # Prefer the largest multiple-of-128 divisor (no masked tiles) as long
        # as it is not much smaller than the budgeted tile.
        for cand in range(max_t, 127, -128):
            if hw % cand == 0:
                if cand >= max(512, max_t // 2):
                    return cand
                break
    return max_t                                    # cdiv grid, masked last tile


def layer_norm_2d(x, weight, bias, *, eps=1e-6):
    """LayerNorm2d.forward.  x: (B, C, H, W); weight, bias: (C,)."""
    B, C, H, W = x.shape
    hw = H * W
    x2 = x.reshape(B, C, hw)                                     # metadata reshape
    wb = jnp.stack([weight, bias]).astype(jnp.float32)[:, :, None]  # (2, C, 1)

    budget = _block_budget_bytes()
    bt = _choose_batch_tile(B, C, hw, budget)
    t = _choose_spatial_tile(hw, C, bt, budget)

    n_b = B // bt
    n_s = pl.cdiv(hw, t)
    # v7x has two TensorCores: if the parallel grid collapsed to one step and
    # there is enough spatial extent, force a split of the spatial axis.
    if n_b * n_s < 2 and hw >= 256:
        t = max(128, _round_up(hw, 256) // 2)
        n_s = pl.cdiv(hw, t)
    grid = (n_b, n_s)

    # Explicit scoped-VMEM request: double-buffered in/out blocks, promoted f32
    # temporaries, the padded (2, C, 1) param tile, plus headroom.
    itemsize = jnp.dtype(x.dtype).itemsize
    in_block = bt * C * t * itemsize
    f32_block = bt * C * t * 4
    wb_block = 2 * _round_up(C, 8) * 128 * 4
    vmem_need = (2 * in_block          # double-buffered input
                 + 2 * in_block        # double-buffered output
                 + 4 * f32_block       # promoted x + elementwise temporaries
                 + 2 * wb_block
                 + (4 << 20))          # headroom
    vmem_limit = int(min(max(vmem_need, 24 << 20), 56 << 20))

    out = pl.pallas_call(
        functools.partial(_layer_norm_2d_kernel, eps=float(eps)),
        out_shape=jax.ShapeDtypeStruct((B, C, hw), x.dtype),
        grid=grid,
        in_specs=[
            pl.BlockSpec((bt, C, t), lambda b, s: (b, 0, s)),
            pl.BlockSpec((2, C, 1), lambda b, s: (0, 0, 0)),
        ],
        out_specs=pl.BlockSpec((bt, C, t), lambda b, s: (b, 0, s)),
        compiler_params=pltpu.CompilerParams(
            dimension_semantics=("parallel", "parallel"),
            vmem_limit_bytes=vmem_limit),
    )(x2, wb)
    return out.reshape(B, C, H, W)


def _reference_forward(x, weight, bias, eps=1e-6):
    """Pure-JAX mirror of the PyTorch module (correctness check)."""
    u = x.mean(axis=1, keepdims=True)
    s = ((x - u) ** 2).mean(axis=1, keepdims=True)
    xn = (x - u) / jnp.sqrt(s + eps)
    return weight[None, :, None, None] * xn + bias[None, :, None, None]


if __name__ == "__main__":
    key = jax.random.PRNGKey(0)
    k_x, k_w, k_b = jax.random.split(key, 3)

    B, C, H, W = 2, 4, 16, 16
    x = jax.random.normal(k_x, (B, C, H, W), dtype=jnp.float32)
    # Module init is weight=1, bias=0; use random values to exercise the affine.
    weight = 1.0 + 0.1 * jax.random.normal(k_w, (C,), dtype=jnp.float32)
    bias = 0.1 * jax.random.normal(k_b, (C,), dtype=jnp.float32)

    y = layer_norm_2d(x, weight, bias, eps=1e-6)
    y = jax.block_until_ready(y)

    ref = _reference_forward(x, weight, bias, eps=1e-6)
    np.testing.assert_allclose(np.asarray(y), np.asarray(ref), rtol=1e-4, atol=1e-5)
    assert y.shape == (B, C, H, W)
    assert y.dtype == x.dtype

    print("KERNEL_OK")
</pallas_src>

<mosaic_0001>
module attributes {stable_mosaic.version = 11 : i64} {
  func.func @_layer_norm_2d_kernel(%arg0: i32, %arg1: i32, %arg2: memref<1x4x256xf32, #tpu.memory_space<vmem>>, %arg3: memref<2x4x1xf32, #tpu.memory_space<vmem>>, %arg4: memref<1x4x256xf32, #tpu.memory_space<vmem>>) attributes {dimension_semantics = [#tpu.dimension_semantics<parallel>, #tpu.dimension_semantics<parallel>], iteration_bounds = array<i64: 2, 1>, scalar_prefetch = 0 : i64, scratch_operands = 0 : i64, tpu.core_type = #tpu.core_type<tc>, window_params = [{transform_indices = @transform_0, window_bounds = array<i64: 1, 4, 256>}, {pipeline_mode = #tpu.pipeline_mode<synchronous>, transform_indices = @transform_1, window_bounds = array<i64: 2, 4, 1>}, {transform_indices = @transform_2, window_bounds = array<i64: 1, 4, 256>}]} {
    %c0 = arith.constant 0 : index
    %c0_0 = arith.constant 0 : index
    %c0_1 = arith.constant 0 : index
    %0 = vector.load %arg2[%c0, %c0_0, %c0_1] : memref<1x4x256xf32, #tpu.memory_space<vmem>>, vector<1x4x256xf32>
    %cst = arith.constant dense<0.000000e+00> : vector<1x256xf32>
    %1 = vector.multi_reduction <add>, %0, %cst [1] : vector<1x4x256xf32> to vector<1x256xf32>
    %2 = vector.shape_cast %1 : vector<1x256xf32> to vector<1x1x256xf32>
    %cst_2 = arith.constant 4.000000e+00 : f32
    %3 = vector.broadcast %cst_2 : f32 to vector<1x1x256xf32>
    %4 = arith.divf %2, %3 : vector<1x1x256xf32>
    %5 = arith.mulf %0, %0 : vector<1x4x256xf32>
    %cst_3 = arith.constant dense<0.000000e+00> : vector<1x256xf32>
    %6 = vector.multi_reduction <add>, %5, %cst_3 [1] : vector<1x4x256xf32> to vector<1x256xf32>
    %7 = vector.shape_cast %6 : vector<1x256xf32> to vector<1x1x256xf32>
    %cst_4 = arith.constant 4.000000e+00 : f32
    %8 = vector.broadcast %cst_4 : f32 to vector<1x1x256xf32>
    %9 = arith.divf %7, %8 : vector<1x1x256xf32>
    %10 = arith.mulf %4, %4 : vector<1x1x256xf32>
    %11 = arith.subf %9, %10 : vector<1x1x256xf32>
    %cst_5 = arith.constant 0.000000e+00 : f32
    %12 = vector.broadcast %cst_5 : f32 to vector<1x1x256xf32>
    %13 = arith.maximumf %11, %12 : vector<1x1x256xf32>
    %cst_6 = arith.constant 9.99999997E-7 : f32
    %14 = vector.broadcast %cst_6 : f32 to vector<1x1x256xf32>
    %15 = arith.addf %13, %14 : vector<1x1x256xf32>
    %16 = math.rsqrt %15 : vector<1x1x256xf32>
    %c0_7 = arith.constant 0 : index
    %c0_8 = arith.constant 0 : index
    %c0_9 = arith.constant 0 : index
    %17 = vector.load %arg3[%c0_7, %c0_8, %c0_9] : memref<2x4x1xf32, #tpu.memory_space<vmem>>, vector<2x4x1xf32>
    %18 = vector.extract_strided_slice %17 {offsets = [0, 0, 0], sizes = [1, 4, 1], strides = [1, 1, 1]} : vector<2x4x1xf32> to vector<1x4x1xf32>
    %19 = vector.shape_cast %18 : vector<1x4x1xf32> to vector<4x1xf32>
    %20 = vector.extract_strided_slice %17 {offsets = [1, 0, 0], sizes = [1, 4, 1], strides = [1, 1, 1]} : vector<2x4x1xf32> to vector<1x4x1xf32>
    %21 = vector.shape_cast %20 : vector<1x4x1xf32> to vector<4x1xf32>
    %22 = vector.shape_cast %19 : vector<4x1xf32> to vector<1x4x1xf32>
    %23 = vector.broadcast %22 : vector<1x4x1xf32> to vector<1x4x256xf32>
    %24 = vector.broadcast %16 : vector<1x1x256xf32> to vector<1x4x256xf32>
    %25 = arith.mulf %23, %24 : vector<1x4x256xf32>
    %26 = vector.broadcast %4 : vector<1x1x256xf32> to vector<1x4x256xf32>
    %27 = arith.mulf %26, %25 : vector<1x4x256xf32>
    %28 = vector.shape_cast %21 : vector<4x1xf32> to vector<1x4x1xf32>
    %29 = vector.broadcast %28 : vector<1x4x1xf32> to vector<1x4x256xf32>
    %30 = arith.subf %29, %27 : vector<1x4x256xf32>
    %31 = arith.mulf %0, %25 : vector<1x4x256xf32>
    %32 = arith.addf %31, %30 : vector<1x4x256xf32>
    %c0_10 = arith.constant 0 : index
    %c0_11 = arith.constant 0 : index
    %c0_12 = arith.constant 0 : index
    %33 = vector.load %arg4[%c0_10, %c0_11, %c0_12] : memref<1x4x256xf32, #tpu.memory_space<vmem>>, vector<1x4x256xf32>
    tpu.vector_store %arg4[%c0_10, %c0_11, %c0_12], %32 {strides = array<i32>} : memref<1x4x256xf32, #tpu.memory_space<vmem>>, vector<1x4x256xf32>,
    return
  }
  func.func @transform_0(%arg0: i32, %arg1: i32) -> (i32, i32, i32) {
    %c0_i32 = arith.constant 0 : i32
    %c0_i32_0 = arith.constant 0 : i32
    return %arg0, %c0_i32, %arg1 : i32, i32, i32
  }
  func.func @transform_1(%arg0: i32, %arg1: i32) -> (i32, i32, i32) {
    %c0_i32 = arith.constant 0 : i32
    %c0_i32_0 = arith.constant 0 : i32
    %c0_i32_1 = arith.constant 0 : i32
    %c0_i32_2 = arith.constant 0 : i32
    return %c0_i32, %c0_i32_0, %c0_i32_1 : i32, i32, i32
  }
  func.func @transform_2(%arg0: i32, %arg1: i32) -> (i32, i32, i32) {
    %c0_i32 = arith.constant 0 : i32
    %c0_i32_0 = arith.constant 0 : i32
    return %arg0, %c0_i32, %arg1 : i32, i32, i32
  }
}

</mosaic_0001>

<llo_original>
// kernel: tpu_custom_call.1
$region0: #{tpu_custom_call.1}
  #allocation0 [shape = 'u32[]', space=smem, size = 0x4, offset = 0x4, fixed_abs, tag = 'smem constant byte address 0x4 - core index']
  #allocation1 [shape = 'u32[144,128]{1,0:T(1,128)}', space=vmem, size = 0x12000, scoped, tag = 'internal scratch']
  %s0 = inlined_call_operand.hbm [shape: f32[2,4,256], index: 0, kind: input, shape index: {}]
  %s1 = inlined_call_operand.vmem [shape: f32[2,4,1], index: 1, kind: input, shape index: {}]
  %s2 = inlined_call_operand.hbm [shape: f32[2,4,256], index: 2, kind: output, shape index: {}]
  %s3 = sld [smem:[#allocation0]]
  $region45: #{tpu_custom_call.1} parent=0
    _
  %s5 = ssub.s32 1, %s3
  %s6 = scalar_select 0, %s5, %s3
  $region1: #{tpu_custom_call.1} parent=0
    #allocation2 [shape = 'u8[8192]{0}', space=vmem, size = 0x2000, scoped, tag = 'input window, operand 0']
    #allocation3 [shape = 's32[2]{0}', space=sflag, size = 0x8, scoped, tag = 'scoped memory for tpu_custom_call.1']
    #allocation4 [shape = 's32[2]{0}', space=sflag, size = 0x8, scoped, tag = 'scoped memory for tpu_custom_call.1']
    #allocation5 [shape = 'u8[8192]{0}', space=vmem, size = 0x2000, scoped, tag = 'output window, operand 0']
    %7 = vsyncpa [#allocation3], 0
    %s8 = scalar_lea.sflag [#allocation3], 1
    %9 = vsyncpa %s8, 0
    %10 = vsyncpa [#allocation4], 0
    %s11 = scalar_lea.sflag [#allocation4], 1
    %12 = vsyncpa %s11, 0
    loop: start=0, step=1, limit=4
    $region2: #{tpu_custom_call.1} parent=1 // loop_pre_header
      _
    $region3: #{tpu_custom_call.1} parent=1 // loop_header
      %s14 = sphi 0, %s18
      %p15 = scmp.ge.s32.totalorder %s14, 4
      %s21 = sphi 0, %s33
      %s22 = sphi 0, %s29
      %s23 = sphi 0, %s21
      %s24 = sphi 0, %s22
      %s25 = sphi 0, %s23
      %s26 = sphi 0, %s24
      %s38 = sphi 0, %s40
      %s41 = sphi 0, %s38
      %s42 = sphi 0, %s41
      %s58 = sphi 0, %s42
      %s62 = sphi 0, %s62
      %s64 = sphi 0, %s62
      %s65 = sphi 0, %s64
      %s79 = sphi 0, %s65
      %s87 = sphi 0, %s89
      %s90 = sphi 0, %s87
      %s91 = sphi 0, %s90
      %s107 = sphi 0, %s91
    $region4: #{tpu_custom_call.1} parent=1 // loop_header_branch
      %17 = sbr.rel (%p15) target = $region8
    $region5: #{tpu_custom_call.1} parent=1 // loop_body
      %s19 = ssub.s32 %s14, 1
      %s20 = ssub.s32 %s14, 2
      %s27 = sadd.s32 1, %s22
      %p28 = scmp.ge.s32.totalorder %s27, 1
      %s29 = scalar_select %p28, 0, %s27
      %s30 = sadd.s32 1, %s21
      %s31 = scalar_select %p28, %s30, %s21
      %p32 = scmp.ge.s32.totalorder %s31, 2
      %s33 = scalar_select %p32, 0, %s31
      %s34 = ssub.s32 %s21, %s33
      %s35 = ssub.s32 %s22, %s29
      %s36 = sor.u32 %s34, %s35
      %p37 = scmp.eq.s32.totalorder %s36, 0
      %s39 = sadd.s32 %s38, 1
      %s40 = scalar_select %p37, %s38, %s39
      %p43 = pneg %p37
      %p44 = scmp.eq.s32.totalorder %s14, 1
      %p45 = por %p43, %p44
      %p46 = scmp.ne.s32.totalorder %s38, %s41
      %p47 = scmp.eq.s32.totalorder %s14, 0
      %p48 = por %p46, %p47
      %p49 = scmp.ne.s32.totalorder %s38, %s41
      %p50 = scmp.eq.s32.totalorder %s19, 1
      %p51 = por %p49, %p50
      %p52 = scmp.ne.s32.totalorder %s41, %s42
      %p53 = scmp.eq.s32.totalorder %s19, 0
      %p54 = por %p52, %p53
      %p55 = scmp.ne.s32.totalorder %s41, %s42
      %p56 = scmp.eq.s32.totalorder %s20, 1
      %p57 = por %p55, %p56
      %p59 = scmp.ne.s32.totalorder %s42, %s58
      %p60 = scmp.eq.s32.totalorder %s20, 0
      %p61 = por %p59, %p60
      %s63 = sadd.s32 %s62, 1
      %p66 = scmp.eq.s32.totalorder %s14, 1
      %p67 = scmp.ne.s32.totalorder %s62, %s64
      %p68 = scmp.eq.s32.totalorder %s14, 0
      %p69 = por %p67, %p68
      %p70 = scmp.ne.s32.totalorder %s62, %s64
      %p71 = scmp.eq.s32.totalorder %s19, 1
      %p72 = por %p70, %p71
      %p73 = scmp.ne.s32.totalorder %s64, %s65
      %p74 = scmp.eq.s32.totalorder %s19, 0
      %p75 = por %p73, %p74
      %p76 = scmp.ne.s32.totalorder %s64, %s65
      %p77 = scmp.eq.s32.totalorder %s20, 1
      %p78 = por %p76, %p77
      %p80 = scmp.ne.s32.totalorder %s65, %s79
      %p81 = scmp.eq.s32.totalorder %s20, 0
      %p82 = por %p80, %p81
      %s83 = ssub.s32 %s21, %s33
      %s84 = ssub.s32 %s22, %s29
      %s85 = sor.u32 %s83, %s84
      %p86 = scmp.eq.s32.totalorder %s85, 0
      %s88 = sadd.s32 %s87, 1
      %s89 = scalar_select %p86, %s87, %s88
      %p92 = pneg %p86
      %p93 = scmp.eq.s32.totalorder %s14, 1
      %p94 = por %p92, %p93
      %p95 = scmp.ne.s32.totalorder %s87, %s90
      %p96 = scmp.eq.s32.totalorder %s14, 0
      %p97 = por %p95, %p96
      %p98 = scmp.ne.s32.totalorder %s87, %s90
      %p99 = scmp.eq.s32.totalorder %s19, 1
      %p100 = por %p98, %p99
      %p101 = scmp.ne.s32.totalorder %s90, %s91
      %p102 = scmp.eq.s32.totalorder %s19, 0
      %p103 = por %p101, %p102
      %p104 = scmp.ne.s32.totalorder %s90, %s91
      %p105 = scmp.eq.s32.totalorder %s20, 1
      %p106 = por %p104, %p105
      %p108 = scmp.ne.s32.totalorder %s91, %s107
      %p109 = scmp.eq.s32.totalorder %s20, 0
      %p110 = por %p108, %p109
      %p111 = scmp.le.s32.totalorder 1, %s14
      %p112 = scmp.lt.s32.totalorder %s14, 3
      %p113 = pnand %p111, %p112
      %p114 = pneg %p113
      // Predicated region
      $region9: #{tpu_custom_call.1} parent=5 // pred_check
        _
      $region10: #{tpu_custom_call.1} parent=5 // pred_check_branch
        %116 = sbr.rel (%p113) target = $region12
      $region11: #{tpu_custom_call.1} parent=5 // pred_region
        %s117 = ssub.s32 %s14, 1
        // Predicated region
        $region13: #{tpu_custom_call.1} parent=11 // pred_check
          %p118 = pneg %p75
        $region14: #{tpu_custom_call.1} parent=11 // pred_check_branch
          %120 = sbr.rel (%p118) target = $region16
        $region15: #{tpu_custom_call.1} parent=11 // pred_region
          _
        $region16: #{tpu_custom_call.1} parent=11 // pred_fallthru
          _
      $region12: #{tpu_custom_call.1} parent=5 // pred_fallthru
        _
      %p121 = scmp.lt.s32.totalorder %s14, 2
      // Predicated region
      $region17: #{tpu_custom_call.1} parent=5 // pred_check
        %p122 = pneg %p121
      $region18: #{tpu_custom_call.1} parent=5 // pred_check_branch
        %124 = sbr.rel (%p122) target = $region20
      $region19: #{tpu_custom_call.1} parent=5 // pred_region
        // Predicated region
        $region21: #{tpu_custom_call.1} parent=19 // pred_check
          %p125 = pneg %p48
        $region22: #{tpu_custom_call.1} parent=19 // pred_check_branch
          %127 = sbr.rel (%p125) target = $region24
        $region23: #{tpu_custom_call.1} parent=19 // pred_region
          %s128 = sand.u32 %s38, 1
          %s129 = scalar_lea.sflag [#allocation3], %s128
          %s130 = sand.u32 %s38, 1
          %s131 = smul.addr %s130, 8
          %s132 = scalar_lea.vmem [#allocation2], %s131
          %s133 = smul.u32 2, %s22
          %s135 = ssub.s32 128, 128
          %136 = vsyncadd %s129, %s135
          %s137 = smul.addr %s21, 2
          %s138 = sadd.s32 %s133, %s137
          %s139 = smul.addr %s138, 64
          %s140 = scalar_lea.hbm %s0, %s139
          %s142 = sshll.u32 %s132, 4
          %s143 = int_to_ptr.vmem [resolvable:$true] %s142
          %145 = dma.hbm_to_vmem [thread:$0]  %s140, 128, %s143, %s129
        $region24: #{tpu_custom_call.1} parent=19 // pred_fallthru
          _
      $region20: #{tpu_custom_call.1} parent=5 // pred_fallthru
        _
      %p146 = scmp.le.s32.totalorder 1, %s14
      %p147 = scmp.lt.s32.totalorder %s14, 3
      %p148 = pnand %p146, %p147
      %p149 = pneg %p148
      // Predicated region
      $region25: #{tpu_custom_call.1} parent=5 // pred_check
        _
      $region26: #{tpu_custom_call.1} parent=5 // pred_check_branch
        %151 = sbr.rel (%p148) target = $region28
      $region27: #{tpu_custom_call.1} parent=5 // pred_region
        %s152 = ssub.s32 %s14, 1
        %s153 = sand.u32 %s41, 1
        %s154 = scalar_lea.sflag [#allocation3], %s153
        %s155 = sand.u32 %s41, 1
        %s156 = smul.addr %s155, 8
        %s157 = scalar_lea.vmem [#allocation2], %s156
        // Predicated region
        $region29: #{tpu_custom_call.1} parent=27 // pred_check
          %p158 = pneg %p54
        $region30: #{tpu_custom_call.1} parent=27 // pred_check_branch
          %160 = sbr.rel (%p158) target = $region32
        $region31: #{tpu_custom_call.1} parent=27 // pred_region
          %161 = dma.done %s154, 128
        $region32: #{tpu_custom_call.1} parent=27 // pred_fallthru
          _
        %s162 = sand.u32 %s41, 1
        %s163 = scalar_lea.sflag [#allocation3], %s162
        %s164 = sand.u32 %s41, 1
        %s165 = smul.addr %s164, 8
        %s166 = scalar_lea.vmem [#allocation2], %s165
        %p167 = pneg %p54
        %p168 = pneg %p51
        %p169 = pneg %p75
        %p170 = pneg %p72
        %p171 = pneg %p103
        %p172 = pneg %p100
        %s173 = sand.u32 %s90, 1
        %s174 = scalar_lea.sflag [#allocation4], %s173
        %s175 = sand.u32 %s90, 1
        %s176 = smul.addr %s175, 8
        %s177 = scalar_lea.vmem [#allocation5], %s176
        %s178 = smul.u32 2, %s24
        %s179 = smul.u32 2, %s24
        %v180 = vld [vmem:[%s157] sm:$0xff]
        %v182 = vcombine.high %v180, %v180
        %vm184 = vcmask 1043456
        %v185 = vsel %vm184, %v180, 0.0
        %v186 = vrot.slane %v185, 4
        %v187 = vadd.f32 %v185, %v186
        %v188 = vrot.slane %v187, 2
        %v189 = vadd.f32 %v187, %v188
        %v190 = vrot.slane %v189, 1
        %v191 = vadd.f32 %v189, %v190
        %v192 = vsel %vm184, %v182, 0.0
        %v193 = vrot.slane %v192, 4
        %v194 = vadd.f32 %v192, %v193
        %v195 = vrot.slane %v194, 2
        %v196 = vadd.f32 %v194, %v195
        %v197 = vrot.slane %v196, 1
        %v198 = vadd.f32 %v196, %v197
        %v199 = vrcp.pop 4.0
        %v200 = vmul.f32 %v191, %v199
        %v201 = vmul.f32 %v198, %v199
        %v202 = vmul.f32 %v180, %v180
        %v204 = vcombine.high %v202, %v202
        %v206 = vsel %vm184, %v202, 0.0
        %v207 = vrot.slane %v206, 4
        %v208 = vadd.f32 %v206, %v207
        %v209 = vrot.slane %v208, 2
        %v210 = vadd.f32 %v208, %v209
        %v211 = vrot.slane %v210, 1
        %v212 = vadd.f32 %v210, %v211
        %v213 = vsel %vm184, %v204, 0.0
        %v214 = vrot.slane %v213, 4
        %v215 = vadd.f32 %v213, %v214
        %v216 = vrot.slane %v215, 2
        %v217 = vadd.f32 %v215, %v216
        %v218 = vrot.slane %v217, 1
        %v219 = vadd.f32 %v217, %v218
        %v220 = vmul.f32 %v212, %v199
        %v221 = vmul.f32 %v219, %v199
        %v222 = vmul.f32 %v200, %v200
        %v223 = vmul.f32 %v201, %v201
        %v224 = vsub.f32 %v220, %v222
        %v225 = vsub.f32 %v221, %v223
        %v226 = vmax.f32 %v224, 0.0
        %v227 = vmax.f32 %v225, 0.0
        %v228 = vadd.f32 %v226, 1e-06
        %v229 = vadd.f32 %v227, 1e-06
        %v230 = vrsqrt.pop %v228
        %v231 = vrsqrt.pop %v229
        %v232 = vld [vmem:[%s1] sm:$0xf]
        %v233 = vld [vmem:[%s1 + $0x4] sm:$0xf]
        %235 = vset.pattern.permute.xlu0 0
        %236 = vperm.xlu0 %235, %v232
        %v237 = vpop.permute.xlu0 %236
        %v239 = vmul.f32 %v237, %v230
        %v240 = vmul.f32 %v237, %v231
        %v241 = vmul.f32 %v200, %v239
        %v242 = vmul.f32 %v201, %v240
        %244 = vset.pattern.permute.xlu0 0
        %245 = vperm.xlu0 %244, %v233
        %v246 = vpop.permute.xlu0 %245
        %v248 = vsub.f32 %v246, %v241
        %v249 = vsub.f32 %v246, %v242
        %v252 = vcombine.low %v239, %v240
        %v254 = vmul.f32 %v180, %v252
        %v257 = vcombine.low %v248, %v249
        %v259 = vadd.f32 %v254, %v257
        %260 = vst [vmem:[%s177] sm:$0xff] %v259
        %s261 = sand.u32 %s90, 1
        %s262 = scalar_lea.sflag [#allocation4], %s261
        %s263 = sand.u32 %s90, 1
        %s264 = smul.addr %s263, 8
        %s265 = scalar_lea.vmem [#allocation5], %s264
        // Predicated region
        $region33: #{tpu_custom_call.1} parent=27 // pred_check
          %p266 = pneg %p100
        $region34: #{tpu_custom_call.1} parent=27 // pred_check_branch
          %268 = sbr.rel (%p266) target = $region36
        $region35: #{tpu_custom_call.1} parent=27 // pred_region
          %s269 = smul.u32 2, %s24
          %s271 = ssub.s32 128, 128
          %272 = vsyncadd %s262, %s271
          %s273 = smul.addr %s23, 2
          %s274 = sadd.s32 %s269, %s273
          %s275 = smul.addr %s274, 64
          %s276 = scalar_lea.hbm %s2, %s275
          %s278 = sshll.u32 %s265, 4
          %s279 = int_to_ptr.vmem [resolvable:$true] %s278
          %281 = dma.vmem_to_hbm [thread:$0]  %s279, 128, %s276, %s262
        $region36: #{tpu_custom_call.1} parent=27 // pred_fallthru
          _
      $region28: #{tpu_custom_call.1} parent=5 // pred_fallthru
        _
      %p282 = scmp.le.s32.totalorder 2, %s14
      // Predicated region
      $region37: #{tpu_custom_call.1} parent=5 // pred_check
        %p283 = pneg %p282
      $region38: #{tpu_custom_call.1} parent=5 // pred_check_branch
        %285 = sbr.rel (%p283) target = $region40
      $region39: #{tpu_custom_call.1} parent=5 // pred_region
        %s286 = ssub.s32 %s14, 2
        // Predicated region
        $region41: #{tpu_custom_call.1} parent=39 // pred_check
          %p287 = pneg %p106
        $region42: #{tpu_custom_call.1} parent=39 // pred_check_branch
          %289 = sbr.rel (%p287) target = $region44
        $region43: #{tpu_custom_call.1} parent=39 // pred_region
          %s290 = sand.u32 %s91, 1
          %s291 = scalar_lea.sflag [#allocation4], %s290
          %s292 = sand.u32 %s91, 1
          %s293 = smul.addr %s292, 8
          %s294 = scalar_lea.vmem [#allocation5], %s293
          %295 = dma.done %s291, 128
        $region44: #{tpu_custom_call.1} parent=39 // pred_fallthru
          _
      $region40: #{tpu_custom_call.1} parent=5 // pred_fallthru
        _
    $region6: #{tpu_custom_call.1} parent=1 // loop_footer
      %s18 = sadd.s32 1, %s14
    $region7: #{tpu_custom_call.1} parent=1 // loop_footer_branch
      %13 = sbr.rel target = $region3
    $region8: #{tpu_custom_call.1} parent=1 // loop_exit
      _
    %296 = vsyncpa [#allocation3], 1
    %s297 = scalar_lea.sflag [#allocation3], 1
    %298 = vsyncpa %s297, 1
    %299 = vsyncpa [#allocation4], 1
    %s300 = scalar_lea.sflag [#allocation4], 1
    %301 = vsyncpa %s300, 1

</llo_original>
